<compile_context>
chip_gen: v5e
topology: v5e:2x2
jax: 0.10.0
libtpu: 0.0.40
codegen_flags: <defaults>
</compile_context>

<pallas_src>
import functools

import jax
import jax.numpy as jnp
from jax.experimental import pallas as pl
from jax.experimental.pallas import tpu as pltpu


def _round_up(x, m):
    return (x + m - 1) // m * m


@functools.lru_cache(maxsize=1)
def _default_gemm_tiles():
    """(tm, tn) GEMM tile defaults per TPU generation (v5e has a 128-wide MXU)."""
    try:
        kind = jax.devices()[0].device_kind.lower()
    except Exception:
        kind = ""
    if "v5 lite" in kind or "v5e" in kind or "v5litepod" in kind:
        return 128, 256
    return 256, 512


# ----------------------------------------------------------------------------
# Generic tiled  X @ W + b  kernel (input projection & vocab projection).
# ----------------------------------------------------------------------------
def _matmul_bias_kernel(x_ref, w_ref, b_ref, o_ref):
    o_ref[...] = (jnp.dot(x_ref[...], w_ref[...],
                          preferred_element_type=jnp.float32)
                  + b_ref[...]).astype(o_ref.dtype)


def matmul_bias(x, w, b, *, out_dtype=jnp.float32, tm=None, tn=None):
    """x: (M, K), w: (K, N), b: (1, N) f32 -> (M, N) out_dtype, tiled over (M, N)."""
    M, K = x.shape
    N = w.shape[1]
    tm_d, tn_d = _default_gemm_tiles()
    tm = tm_d if tm is None else tm
    tn = tn_d if tn is None else tn
    tm = min(tm, _round_up(M, 8))
    tn = min(tn, _round_up(N, 128))
    Mp, Np = _round_up(M, tm), _round_up(N, tn)

    xp = jnp.pad(x, ((0, Mp - M), (0, 0)))
    wp = jnp.pad(w, ((0, 0), (0, Np - N)))
    bp = jnp.pad(b, ((0, 0), (0, Np - N)))

    in_bytes = jnp.dtype(x.dtype).itemsize
    out_bytes = jnp.dtype(out_dtype).itemsize
    cost = pl.CostEstimate(
        flops=2 * Mp * Np * K,
        transcendentals=0,
        bytes_accessed=in_bytes * (Mp * K + K * Np) + out_bytes * Mp * Np)

    # TODO(synk): on v5e, if xprof shows exposed DMA on the pure-W-stream vocab
    #             GEMM, raise the W spec to pipeline_mode=pl.Buffered(3).
    out = pl.pallas_call(
        _matmul_bias_kernel,
        out_shape=jax.ShapeDtypeStruct((Mp, Np), out_dtype),
        grid_spec=pltpu.PrefetchScalarGridSpec(
            num_scalar_prefetch=0,
            grid=(Mp // tm, Np // tn),
            in_specs=[
                pl.BlockSpec((tm, K), lambda i, j: (i, 0)),   # X row tile
                pl.BlockSpec((K, tn), lambda i, j: (0, j)),   # W col tile
                pl.BlockSpec((1, tn), lambda i, j: (0, j)),   # bias tile
            ],
            out_specs=pl.BlockSpec((tm, tn), lambda i, j: (i, j)),
        ),
        compiler_params=pltpu.CompilerParams(
            dimension_semantics=("parallel", "parallel")),
        cost_estimate=cost,
    )(xp, wp, bp)
    return out[:M, :N]


# ----------------------------------------------------------------------------
# LSTM recurrence: grid over (batch_blocks, T), h/c carried in VMEM scratch.
# gates_x already holds x@Wih^T + (b_ih+b_hh); each step only adds h@Whh^T.
# ----------------------------------------------------------------------------
def _lstm_step_kernel(gx_ref, whh_ref, h_out_ref, h_sc, c_sc):
    t = pl.program_id(1)

    @pl.when(t == 0)
    def _():
        h_sc[...] = jnp.zeros_like(h_sc)
        c_sc[...] = jnp.zeros_like(c_sc)

    Hp = whh_ref.shape[0]
    h = h_sc[...]                                        # f32 carry
    c = c_sc[...]
    gates = (gx_ref[0].astype(jnp.float32)
             + jnp.dot(h.astype(whh_ref.dtype), whh_ref[...],
                       preferred_element_type=jnp.float32))

    def sigmoid(z):                                      # 1 EUP op vs. exp + recip
        return 0.5 * jnp.tanh(0.5 * z) + 0.5

    # PyTorch gate order i, f, g, o — slices are whole lane tiles (Hp % 128 == 0).
    i_g = sigmoid(gates[:, 0 * Hp:1 * Hp])
    f_g = sigmoid(gates[:, 1 * Hp:2 * Hp])
    g_g = jnp.tanh(gates[:, 2 * Hp:3 * Hp])
    o_g = sigmoid(gates[:, 3 * Hp:4 * Hp])
    c_new = f_g * c + i_g * g_g
    h_new = o_g * jnp.tanh(c_new)

    h_out_ref[0] = h_new.astype(h_out_ref.dtype)
    h_sc[...] = h_new
    c_sc[...] = c_new


def lstm_recurrence(gates_x, whh_t, *, out_dtype=jnp.float32):
    """gates_x: (T, Bp, 4Hp), whh_t: (Hp, 4Hp) -> hidden (T, Bp, Hp)."""
    T, Bp, H4 = gates_x.shape
    Hp = whh_t.shape[0]

    # Shard the independent batch dimension across v7x's two TensorCores when
    # large enough; bblk stays a multiple of 16 so bf16 blocks remain aligned.
    batch_blocks = 2 if Bp % 32 == 0 else 1
    bblk = Bp // batch_blocks

    cost = pl.CostEstimate(
        flops=2 * T * Bp * Hp * 4 * Hp + 10 * T * Bp * Hp,
        transcendentals=5 * T * Bp * Hp,
        bytes_accessed=(gates_x.size * jnp.dtype(gates_x.dtype).itemsize
                        + whh_t.size * jnp.dtype(whh_t.dtype).itemsize
                        + T * Bp * Hp * jnp.dtype(out_dtype).itemsize))

    # TODO(synk): on single-core chips (v5e/v6e), interleaving two independent
    #             batch halves inside the step would hide MXU-pop/EUP latency.
    return pl.pallas_call(
        _lstm_step_kernel,
        out_shape=jax.ShapeDtypeStruct((T, Bp, Hp), out_dtype),
        grid_spec=pltpu.PrefetchScalarGridSpec(
            num_scalar_prefetch=0,
            grid=(batch_blocks, T),      # T is the innermost (serial) axis
            in_specs=[
                pl.BlockSpec((1, bblk, H4), lambda b, t: (t, b, 0)),
                pl.BlockSpec((Hp, H4), lambda b, t: (0, 0)),
            ],
            out_specs=pl.BlockSpec((1, bblk, Hp), lambda b, t: (t, b, 0)),
            scratch_shapes=[pltpu.VMEM((bblk, Hp), jnp.float32),   # h carry
                            pltpu.VMEM((bblk, Hp), jnp.float32)],  # c carry
        ),
        compiler_params=pltpu.CompilerParams(
            dimension_semantics=("parallel", "arbitrary")),
        cost_estimate=cost,
    )(gates_x, whh_t)


# ----------------------------------------------------------------------------
# One-time parameter preparation (padding / transposes / casts hoisted here).
# ----------------------------------------------------------------------------
def prepare_params(params, *, compute_dtype=jnp.bfloat16):
    embed_tbl = params["embed"]           # (V, E)
    w_ih = params["w_ih"]                 # (4H, E)
    w_hh = params["w_hh"]                 # (4H, H)
    b_ih = params["b_ih"]                 # (4H,)
    b_hh = params["b_hh"]                 # (4H,)
    w_out = params["w_out"]               # (V, H)
    b_out = params["b_out"]               # (V,)

    V, E = embed_tbl.shape
    H = w_hh.shape[1]
    Hp = _round_up(H, 128)                # lane tile per gate
    Vp = _round_up(V, 128)

    def pad_gate_rows(w):                 # (4H, K) -> (4Hp, K), zero-padded per gate
        K = w.shape[1]
        w4 = w.reshape(4, H, K)
        w4 = jnp.pad(w4, ((0, 0), (0, Hp - H), (0, 0)))
        return w4.reshape(4 * Hp, K)

    w_ih_p = pad_gate_rows(w_ih)                                   # (4Hp, E)
    w_hh_p = jnp.pad(pad_gate_rows(w_hh), ((0, 0), (0, Hp - H)))   # (4Hp, Hp)
    bias_p = jnp.pad((b_ih + b_hh).reshape(4, H),
                     ((0, 0), (0, Hp - H))).reshape(1, 4 * Hp)     # (1, 4Hp)
    w_out_p = jnp.pad(w_out, ((0, Vp - V), (0, Hp - H)))           # (Vp, Hp)
    b_out_p = jnp.pad(b_out, (0, Vp - V)).reshape(1, Vp)           # (1, Vp)

    return {
        "embed": embed_tbl,                                        # gather stays f32
        "w_ih_t": jnp.transpose(w_ih_p).astype(compute_dtype),     # (E, 4Hp)
        "w_hh_t": jnp.transpose(w_hh_p).astype(compute_dtype),     # (Hp, 4Hp)
        "bias": bias_p.astype(jnp.float32),                        # (1, 4Hp)
        "w_out_t": jnp.transpose(w_out_p).astype(compute_dtype),   # (Hp, Vp)
        "b_out": b_out_p.astype(jnp.float32),                      # (1, Vp)
        "dims": (E, H, Hp, V, Vp),
        "compute_dtype": compute_dtype,
    }


# ----------------------------------------------------------------------------
# Full forward pass (matches PyTorch DecoderRNN.forward semantics).
# ----------------------------------------------------------------------------
def decoder_rnn_forward(features, captions, prepared):
    """features: (B, E) float32, captions: (B, L) int32 -> (B, L, V) float32."""
    E, H, Hp, V, Vp = prepared["dims"]
    cdt = prepared["compute_dtype"]

    B = features.shape[0]
    L = captions.shape[1]
    T = L                                   # 1 feature step + (L-1) embedding steps
    Bp = _round_up(B, 8)                    # f32 sublane tile

    # --- glue (plain JAX): batch pad, time-major embedding gather, concat ----
    feats_p = jnp.pad(features, ((0, Bp - B), (0, 0)))             # (Bp, E)
    caps_p = jnp.pad(captions, ((0, Bp - B), (0, 0)))              # (Bp, L)
    emb_tm = prepared["embed"][caps_p[:, :-1].T]                   # (T-1, Bp, E)
    inputs_tm = jnp.concatenate([feats_p[None], emb_tm], 0)        # (T, Bp, E)

    # --- hoisted input projection: one big (T*Bp, E) x (E, 4Hp) GEMM ---------
    gates_x = matmul_bias(inputs_tm.reshape(T * Bp, E).astype(cdt),
                          prepared["w_ih_t"], prepared["bias"],
                          out_dtype=cdt)                           # (T*Bp, 4Hp)
    gates_x = gates_x.reshape(T, Bp, 4 * Hp)

    # --- serial LSTM recurrence (grid over T, scratch-carried h/c) -----------
    h_seq = lstm_recurrence(gates_x, prepared["w_hh_t"], out_dtype=cdt)  # (T, Bp, Hp)

    # --- hoisted vocab projection, batch-first logits slab -------------------
    h_bf = jnp.transpose(h_seq, (1, 0, 2)).reshape(Bp * T, Hp)
    logits = matmul_bias(h_bf, prepared["w_out_t"], prepared["b_out"],
                         out_dtype=jnp.float32)                    # (Bp*T, Vp)
    return logits.reshape(Bp, T, Vp)[:B, :, :V]                    # (B, L, V)


# ----------------------------------------------------------------------------
# Pure-JAX reference (torch semantics) for validation.
# ----------------------------------------------------------------------------
def decoder_rnn_reference(features, captions, params):
    embed_tbl = params["embed"]
    w_ih, w_hh = params["w_ih"], params["w_hh"]
    b = params["b_ih"] + params["b_hh"]
    w_out, b_out = params["w_out"], params["b_out"]
    H = w_hh.shape[1]

    embeddings = embed_tbl[captions[:, :-1]]
    inputs = jnp.concatenate([features[:, None, :], embeddings], axis=1)
    B, T, _ = inputs.shape

    def step(carry, x_t):
        h, c = carry
        gates = x_t @ w_ih.T + h @ w_hh.T + b
        i = jax.nn.sigmoid(gates[:, 0 * H:1 * H])
        f = jax.nn.sigmoid(gates[:, 1 * H:2 * H])
        g = jnp.tanh(gates[:, 2 * H:3 * H])
        o = jax.nn.sigmoid(gates[:, 3 * H:4 * H])
        c_new = f * c + i * g
        h_new = o * jnp.tanh(c_new)
        return (h_new, c_new), h_new

    init = (jnp.zeros((B, H), jnp.float32), jnp.zeros((B, H), jnp.float32))
    _, hiddens = jax.lax.scan(step, init, jnp.transpose(inputs, (1, 0, 2)))
    hiddens = jnp.transpose(hiddens, (1, 0, 2))
    return hiddens @ w_out.T + b_out


def init_params(key, embed_size, hidden_size, vocab_size):
    ks = jax.random.split(key, 7)
    scale = 1.0 / jnp.sqrt(hidden_size)
    return {
        "embed": jax.random.normal(ks[0], (vocab_size, embed_size), jnp.float32),
        "w_ih": jax.random.uniform(ks[1], (4 * hidden_size, embed_size),
                                   jnp.float32, -scale, scale),
        "w_hh": jax.random.uniform(ks[2], (4 * hidden_size, hidden_size),
                                   jnp.float32, -scale, scale),
        "b_ih": jax.random.uniform(ks[3], (4 * hidden_size,),
                                   jnp.float32, -scale, scale),
        "b_hh": jax.random.uniform(ks[4], (4 * hidden_size,),
                                   jnp.float32, -scale, scale),
        "w_out": jax.random.uniform(ks[5], (vocab_size, hidden_size),
                                    jnp.float32, -scale, scale),
        "b_out": jax.random.uniform(ks[6], (vocab_size,),
                                    jnp.float32, -scale, scale),
    }


if __name__ == "__main__":
    # Small, LSTM-decoder-consistent shapes.
    B, E, H, V, L = 2, 32, 32, 128, 8   # batch, embed, hidden, vocab, caption len

    key = jax.random.PRNGKey(0)
    k_feat, k_cap, k_par = jax.random.split(key, 3)

    params = init_params(k_par, E, H, V)
    features = jax.random.normal(k_feat, (B, E), jnp.float32)
    captions = jax.random.randint(k_cap, (B, L), 0, V, jnp.int32)

    ref = decoder_rnn_reference(features, captions, params)

    # f32 path: exact structural parity with the reference.
    prep_f32 = prepare_params(params, compute_dtype=jnp.float32)
    out_f32 = jax.block_until_ready(decoder_rnn_forward(features, captions, prep_f32))
    assert out_f32.shape == (B, L, V), out_f32.shape
    assert jnp.allclose(out_f32, ref, atol=1e-4, rtol=1e-4), "f32 mismatch vs reference"

    # bf16-operand path (recommended on v6e/v7x): f32 accumulation, looser tol.
    prep_bf16 = prepare_params(params, compute_dtype=jnp.bfloat16)
    out_bf16 = jax.block_until_ready(decoder_rnn_forward(features, captions, prep_bf16))
    assert out_bf16.shape == (B, L, V), out_bf16.shape
    assert jnp.allclose(out_bf16, ref, atol=5e-2, rtol=5e-2), "bf16 mismatch vs reference"

    print("KERNEL_OK")
</pallas_src>

<mosaic_0001>
module attributes {stable_mosaic.version = 11 : i64} {
  func.func @_matmul_bias_kernel(%arg0: i32, %arg1: i32, %arg2: memref<64x32xf32, #tpu.memory_space<vmem>>, %arg3: memref<32x512xf32, #tpu.memory_space<vmem>>, %arg4: memref<1x512xf32, #tpu.memory_space<vmem>>, %arg5: memref<64x512xf32, #tpu.memory_space<vmem>>) attributes {dimension_semantics = [#tpu.dimension_semantics<parallel>, #tpu.dimension_semantics<parallel>], iteration_bounds = array<i64: 1, 1>, scalar_prefetch = 0 : i64, scratch_operands = 0 : i64, tpu.core_type = #tpu.core_type<tc>, window_params = [{transform_indices = @transform_0, window_bounds = array<i64: 64, 32>}, {transform_indices = @transform_1, window_bounds = array<i64: 32, 512>}, {transform_indices = @transform_2, window_bounds = array<i64: 1, 512>}, {transform_indices = @transform_3, window_bounds = array<i64: 64, 512>}]} {
    %c0 = arith.constant 0 : index
    %c0_0 = arith.constant 0 : index
    %0 = vector.load %arg2[%c0, %c0_0] : memref<64x32xf32, #tpu.memory_space<vmem>>, vector<64x32xf32>
    %c0_1 = arith.constant 0 : index
    %c0_2 = arith.constant 0 : index
    %1 = vector.load %arg3[%c0_1, %c0_2] : memref<32x512xf32, #tpu.memory_space<vmem>>, vector<32x512xf32>
    %cst = arith.constant dense<0.000000e+00> : vector<64x512xf32>
    %2 = tpu.matmul %0, %1, %cst {dimension_numbers = #tpu.dot_dimension_numbers<[1], [0], [0], [1], [0, 0, 1, 1], [], []>} : vector<64x32xf32>, vector<32x512xf32>, vector<64x512xf32> -> vector<64x512xf32>
    %c0_3 = arith.constant 0 : index
    %c0_4 = arith.constant 0 : index
    %3 = vector.load %arg4[%c0_3, %c0_4] : memref<1x512xf32, #tpu.memory_space<vmem>>, vector<1x512xf32>
    %4 = vector.broadcast %3 : vector<1x512xf32> to vector<64x512xf32>
    %5 = arith.addf %2, %4 : vector<64x512xf32>
    %c0_5 = arith.constant 0 : index
    %c0_6 = arith.constant 0 : index
    %6 = vector.load %arg5[%c0_5, %c0_6] : memref<64x512xf32, #tpu.memory_space<vmem>>, vector<64x512xf32>
    tpu.vector_store %arg5[%c0_5, %c0_6], %5 {strides = array<i32>} : memref<64x512xf32, #tpu.memory_space<vmem>>, vector<64x512xf32>,
    return
  }
  func.func @transform_0(%arg0: i32, %arg1: i32) -> (i32, i32) {
    %c0_i32 = arith.constant 0 : i32
    %c0_i32_0 = arith.constant 0 : i32
    return %arg0, %c0_i32 : i32, i32
  }
  func.func @transform_1(%arg0: i32, %arg1: i32) -> (i32, i32) {
    %c0_i32 = arith.constant 0 : i32
    %c0_i32_0 = arith.constant 0 : i32
    return %c0_i32, %arg1 : i32, i32
  }
  func.func @transform_2(%arg0: i32, %arg1: i32) -> (i32, i32) {
    %c0_i32 = arith.constant 0 : i32
    %c0_i32_0 = arith.constant 0 : i32
    return %c0_i32, %arg1 : i32, i32
  }
  func.func @transform_3(%arg0: i32, %arg1: i32) -> (i32, i32) {
    %c0_i32 = arith.constant 0 : i32
    return %arg0, %arg1 : i32, i32
  }
}

</mosaic_0001>

<llo_original>
// kernel: tpu_custom_call.1
$region0: #{tpu_custom_call.1}
  #allocation0 [shape = 'u32[]', space=smem, size = 0x4, offset = 0x4, fixed_abs, tag = 'smem constant byte address 0x4 - core index']
  #allocation1 [shape = 'u32[72,128]{1,0:T(1,128)}', space=vmem, size = 0x9000, scoped, tag = 'internal scratch']
  %s0 = inlined_call_operand.vmem [shape: f32[64,32], index: 0, kind: input, shape index: {}]
  %s1 = inlined_call_operand.hbm [shape: f32[32,512], index: 1, kind: input, shape index: {}]
  %s2 = inlined_call_operand.vmem [shape: f32[1,512], index: 2, kind: input, shape index: {}]
  %s3 = inlined_call_operand.hbm [shape: f32[64,512], index: 3, kind: output, shape index: {}]
  %s4 = sld [smem:[#allocation0]]
  $region26: #{tpu_custom_call.1} parent=0
    _
  %s6 = ssub.s32 1, %s4
  %s7 = scalar_select 0, %s6, %s4
  $region1: #{tpu_custom_call.1} parent=0
    #allocation2 [shape = 'u8[65536]{0}', space=vmem, size = 0x10000, scoped, tag = 'input window, operand 1, single buffered']
    #allocation3 [shape = 's32[1]{0}', space=sflag, size = 0x4, scoped, tag = 'scoped memory for tpu_custom_call.1']
    #allocation4 [shape = 's32[1]{0}', space=sflag, size = 0x4, scoped, tag = 'scoped memory for tpu_custom_call.1']
    #allocation5 [shape = 'u8[131072]{0}', space=vmem, size = 0x20000, scoped, tag = 'output window, operand 0, single buffered']
    %8 = vsyncpa [#allocation3], 0
    %9 = vsyncpa [#allocation4], 0
    // Predicated region
    $region2: #{tpu_custom_call.1} parent=1 // pred_check
      _
    $region3: #{tpu_custom_call.1} parent=1 // pred_check_branch
      %11 = sbr.rel (0) target = $region5
    $region4: #{tpu_custom_call.1} parent=1 // pred_region
      _
    $region5: #{tpu_custom_call.1} parent=1 // pred_fallthru
      _
    // Predicated region
    $region6: #{tpu_custom_call.1} parent=1 // pred_check
      _
    $region7: #{tpu_custom_call.1} parent=1 // pred_check_branch
      %13 = sbr.rel (0) target = $region9
    $region8: #{tpu_custom_call.1} parent=1 // pred_region
      %15 = vsyncadd [#allocation3], 0
      %s16 = sshll.u32 %s1, 4
      %s17 = int_to_ptr.hbm [resolvable:$true] %s16
      %s18 = sshll.u32 [#allocation2], 4
      %s19 = int_to_ptr.vmem [resolvable:$true] %s18
      %24 = dma.hbm_to_vmem [thread:$0]  %s17, 2048, %s19, [#allocation3], 512, 512, 32
    $region9: #{tpu_custom_call.1} parent=1 // pred_fallthru
      _
    // Predicated region
    $region10: #{tpu_custom_call.1} parent=1 // pred_check
      _
    $region11: #{tpu_custom_call.1} parent=1 // pred_check_branch
      %26 = sbr.rel (0) target = $region13
    $region12: #{tpu_custom_call.1} parent=1 // pred_region
      _
    $region13: #{tpu_custom_call.1} parent=1 // pred_fallthru
      _
    // Predicated region
    $region14: #{tpu_custom_call.1} parent=1 // pred_check
      _
    $region15: #{tpu_custom_call.1} parent=1 // pred_check_branch
      %28 = sbr.rel (0) target = $region17
    $region16: #{tpu_custom_call.1} parent=1 // pred_region
      %30 = dma.done [#allocation3], 2048
    $region17: #{tpu_custom_call.1} parent=1 // pred_fallthru
      _
    %v31 = vld [vmem:[%s0] sm:$0xff]
    %v32 = vld [vmem:[%s0 + $0x8] sm:$0xff]
    %v33 = vld [vmem:[%s0 + $0x10] sm:$0xff]
    %v34 = vld [vmem:[%s0 + $0x18] sm:$0xff]
    %v35 = vld [vmem:[%s0 + $0x20] sm:$0xff]
    %v36 = vld [vmem:[%s0 + $0x28] sm:$0xff]
    %v37 = vld [vmem:[%s0 + $0x30] sm:$0xff]
    %v38 = vld [vmem:[%s0 + $0x38] sm:$0xff]
    %v39 = vld [vmem:[#allocation2] sm:$0xff]
    %v40 = vld [vmem:[#allocation2 + $0x8] sm:$0xff]
    %v41 = vld [vmem:[#allocation2 + $0x10] sm:$0xff]
    %v42 = vld [vmem:[#allocation2 + $0x18] sm:$0xff]
    %v43 = vld [vmem:[#allocation2 + $0x20] sm:$0xff]
    %v44 = vld [vmem:[#allocation2 + $0x28] sm:$0xff]
    %v45 = vld [vmem:[#allocation2 + $0x30] sm:$0xff]
    %v46 = vld [vmem:[#allocation2 + $0x38] sm:$0xff]
    %v47 = vld [vmem:[#allocation2 + $0x40] sm:$0xff]
    %v48 = vld [vmem:[#allocation2 + $0x48] sm:$0xff]
    %v49 = vld [vmem:[#allocation2 + $0x50] sm:$0xff]
    %v50 = vld [vmem:[#allocation2 + $0x58] sm:$0xff]
    %v51 = vld [vmem:[#allocation2 + $0x60] sm:$0xff]
    %v52 = vld [vmem:[#allocation2 + $0x68] sm:$0xff]
    %v53 = vld [vmem:[#allocation2 + $0x70] sm:$0xff]
    %v54 = vld [vmem:[#allocation2 + $0x78] sm:$0xff]
    %v55 = vld [vmem:[%s2] sm:$0xf]
    %v57 = vperm.slane %v55, 0
    %v58 = vperm.slane %v55, 1
    %v59 = vperm.slane %v55, 2
    %v60 = vperm.slane %v55, 3
    %vm65 = vcmask 261120
    %v67 = vsel %vm65, %v31, 0
    %v70 = vsel %vm65, %v32, 0
    %v73 = vsel %vm65, %v33, 0
    %v76 = vsel %vm65, %v34, 0
    %v79 = vsel %vm65, %v35, 0
    %v82 = vsel %vm65, %v36, 0
    %v85 = vsel %vm65, %v37, 0
    %v88 = vsel %vm65, %v38, 0
    %90 = vmatpush.msra.mxu0 0.0
    %91 = vmatpush.msra.mxu0 0.0
    %92 = vmatpush.msra.mxu0 0.0
    %93 = vmatpush.msra.mxu0 0.0
    %94 = vmatpush.msra.mxu0 0.0
    %95 = vmatpush.msra.mxu0 0.0
    %96 = vmatpush.msra.mxu0 0.0
    %97 = vmatpush.msra.mxu0 0.0
    %98 = vmatpush.msra.mxu0 0.0
    %99 = vmatpush.msra.mxu0 0.0
    %100 = vmatpush.msra.mxu0 0.0
    %101 = vmatpush.msra.mxu0 0.0
    %102 = vmatpush.msra.mxu0 %v51
    %103 = vmatpush.msra.mxu0 %v47
    %104 = vmatpush.msra.mxu0 %v43
    %105 = vmatpush.msra.mxu0 %v39
    %106 = vmatmul.f32.gmra.mxu0 %v67
    %v107 = vpop.f32.mrf.mxu0
    %v108 = vadd.f32 %v57, %v107
    %109 = vmatmul.f32.gmra.mxu0 %v70
    %v110 = vpop.f32.mrf.mxu0
    %v111 = vadd.f32 %v57, %v110
    %112 = vmatmul.f32.gmra.mxu0 %v73
    %v113 = vpop.f32.mrf.mxu0
    %v114 = vadd.f32 %v57, %v113
    %115 = vmatmul.f32.gmra.mxu0 %v76
    %v116 = vpop.f32.mrf.mxu0
    %v117 = vadd.f32 %v57, %v116
    %118 = vmatmul.f32.gmra.mxu0 %v79
    %v119 = vpop.f32.mrf.mxu0
    %v120 = vadd.f32 %v57, %v119
    %121 = vmatmul.f32.gmra.mxu0 %v82
    %v122 = vpop.f32.mrf.mxu0
    %v123 = vadd.f32 %v57, %v122
    %124 = vmatmul.f32.gmra.mxu0 %v85
    %v125 = vpop.f32.mrf.mxu0
    %v126 = vadd.f32 %v57, %v125
    %127 = vmatmul.f32.gmra.mxu0 %v88
    %v128 = vpop.f32.mrf.mxu0
    %v129 = vadd.f32 %v57, %v128
    %130 = vdwg.mxu0
    %131 = vmatpush.msra.mxu0 0.0
    %132 = vmatpush.msra.mxu0 0.0
    %133 = vmatpush.msra.mxu0 0.0
    %134 = vmatpush.msra.mxu0 0.0
    %135 = vmatpush.msra.mxu0 0.0
    %136 = vmatpush.msra.mxu0 0.0
    %137 = vmatpush.msra.mxu0 0.0
    %138 = vmatpush.msra.mxu0 0.0
    %139 = vmatpush.msra.mxu0 0.0
    %140 = vmatpush.msra.mxu0 0.0
    %141 = vmatpush.msra.mxu0 0.0
    %142 = vmatpush.msra.mxu0 0.0
    %143 = vmatpush.msra.mxu0 %v52
    %144 = vmatpush.msra.mxu0 %v48
    %145 = vmatpush.msra.mxu0 %v44
    %146 = vmatpush.msra.mxu0 %v40
    %147 = vmatmul.f32.gmra.mxu0 %v67
    %v148 = vpop.f32.mrf.mxu0
    %v149 = vadd.f32 %v58, %v148
    %150 = vmatmul.f32.gmra.mxu0 %v70
    %v151 = vpop.f32.mrf.mxu0
    %v152 = vadd.f32 %v58, %v151
    %153 = vmatmul.f32.gmra.mxu0 %v73
    %v154 = vpop.f32.mrf.mxu0
    %v155 = vadd.f32 %v58, %v154
    %156 = vmatmul.f32.gmra.mxu0 %v76
    %v157 = vpop.f32.mrf.mxu0
    %v158 = vadd.f32 %v58, %v157
    %159 = vmatmul.f32.gmra.mxu0 %v79
    %v160 = vpop.f32.mrf.mxu0
    %v161 = vadd.f32 %v58, %v160
    %162 = vmatmul.f32.gmra.mxu0 %v82
    %v163 = vpop.f32.mrf.mxu0
    %v164 = vadd.f32 %v58, %v163
    %165 = vmatmul.f32.gmra.mxu0 %v85
    %v166 = vpop.f32.mrf.mxu0
    %v167 = vadd.f32 %v58, %v166
    %168 = vmatmul.f32.gmra.mxu0 %v88
    %v169 = vpop.f32.mrf.mxu0
    %v170 = vadd.f32 %v58, %v169
    %171 = vdwg.mxu0
    %172 = vmatpush.msra.mxu0 0.0
    %173 = vmatpush.msra.mxu0 0.0
    %174 = vmatpush.msra.mxu0 0.0
    %175 = vmatpush.msra.mxu0 0.0
    %176 = vmatpush.msra.mxu0 0.0
    %177 = vmatpush.msra.mxu0 0.0
    %178 = vmatpush.msra.mxu0 0.0
    %179 = vmatpush.msra.mxu0 0.0
    %180 = vmatpush.msra.mxu0 0.0
    %181 = vmatpush.msra.mxu0 0.0
    %182 = vmatpush.msra.mxu0 0.0
    %183 = vmatpush.msra.mxu0 0.0
    %184 = vmatpush.msra.mxu0 %v53
    %185 = vmatpush.msra.mxu0 %v49
    %186 = vmatpush.msra.mxu0 %v45
    %187 = vmatpush.msra.mxu0 %v41
    %188 = vmatmul.f32.gmra.mxu0 %v67
    %v189 = vpop.f32.mrf.mxu0
    %v190 = vadd.f32 %v59, %v189
    %191 = vmatmul.f32.gmra.mxu0 %v70
    %v192 = vpop.f32.mrf.mxu0
    %v193 = vadd.f32 %v59, %v192
    %194 = vmatmul.f32.gmra.mxu0 %v73
    %v195 = vpop.f32.mrf.mxu0
    %v196 = vadd.f32 %v59, %v195
    %197 = vmatmul.f32.gmra.mxu0 %v76
    %v198 = vpop.f32.mrf.mxu0
    %v199 = vadd.f32 %v59, %v198
    %200 = vmatmul.f32.gmra.mxu0 %v79
    %v201 = vpop.f32.mrf.mxu0
    %v202 = vadd.f32 %v59, %v201
    %203 = vmatmul.f32.gmra.mxu0 %v82
    %v204 = vpop.f32.mrf.mxu0
    %v205 = vadd.f32 %v59, %v204
    %206 = vmatmul.f32.gmra.mxu0 %v85
    %v207 = vpop.f32.mrf.mxu0
    %v208 = vadd.f32 %v59, %v207
    %209 = vmatmul.f32.gmra.mxu0 %v88
    %v210 = vpop.f32.mrf.mxu0
    %v211 = vadd.f32 %v59, %v210
    %212 = vdwg.mxu0
    %213 = vmatpush.msra.mxu0 0.0
    %214 = vmatpush.msra.mxu0 0.0
    %215 = vmatpush.msra.mxu0 0.0
    %216 = vmatpush.msra.mxu0 0.0
    %217 = vmatpush.msra.mxu0 0.0
    %218 = vmatpush.msra.mxu0 0.0
    %219 = vmatpush.msra.mxu0 0.0
    %220 = vmatpush.msra.mxu0 0.0
    %221 = vmatpush.msra.mxu0 0.0
    %222 = vmatpush.msra.mxu0 0.0
    %223 = vmatpush.msra.mxu0 0.0
    %224 = vmatpush.msra.mxu0 0.0
    %225 = vmatpush.msra.mxu0 %v54
    %226 = vmatpush.msra.mxu0 %v50
    %227 = vmatpush.msra.mxu0 %v46
    %228 = vmatpush.msra.mxu0 %v42
    %229 = vmatmul.f32.gmra.mxu0 %v67
    %v230 = vpop.f32.mrf.mxu0
    %v231 = vadd.f32 %v60, %v230
    %232 = vmatmul.f32.gmra.mxu0 %v70
    %v233 = vpop.f32.mrf.mxu0
    %v234 = vadd.f32 %v60, %v233
    %235 = vmatmul.f32.gmra.mxu0 %v73
    %v236 = vpop.f32.mrf.mxu0
    %v237 = vadd.f32 %v60, %v236
    %238 = vmatmul.f32.gmra.mxu0 %v76
    %v239 = vpop.f32.mrf.mxu0
    %v240 = vadd.f32 %v60, %v239
    %241 = vmatmul.f32.gmra.mxu0 %v79
    %v242 = vpop.f32.mrf.mxu0
    %v243 = vadd.f32 %v60, %v242
    %244 = vmatmul.f32.gmra.mxu0 %v82
    %v245 = vpop.f32.mrf.mxu0
    %v246 = vadd.f32 %v60, %v245
    %247 = vmatmul.f32.gmra.mxu0 %v85
    %v248 = vpop.f32.mrf.mxu0
    %v249 = vadd.f32 %v60, %v248
    %250 = vmatmul.f32.gmra.mxu0 %v88
    %v251 = vpop.f32.mrf.mxu0
    %v252 = vadd.f32 %v60, %v251
    %253 = vdwg.mxu0
    %254 = vst [vmem:[#allocation5] sm:$0xff] %v108
    %255 = vst [vmem:[#allocation5 + $0x8] sm:$0xff] %v149
    %256 = vst [vmem:[#allocation5 + $0x10] sm:$0xff] %v190
    %257 = vst [vmem:[#allocation5 + $0x18] sm:$0xff] %v231
    %258 = vst [vmem:[#allocation5 + $0x20] sm:$0xff] %v111
    %259 = vst [vmem:[#allocation5 + $0x28] sm:$0xff] %v152
    %260 = vst [vmem:[#allocation5 + $0x30] sm:$0xff] %v193
    %261 = vst [vmem:[#allocation5 + $0x38] sm:$0xff] %v234
    %262 = vst [vmem:[#allocation5 + $0x40] sm:$0xff] %v114
    %263 = vst [vmem:[#allocation5 + $0x48] sm:$0xff] %v155
    %264 = vst [vmem:[#allocation5 + $0x50] sm:$0xff] %v196
    %265 = vst [vmem:[#allocation5 + $0x58] sm:$0xff] %v237
    %266 = vst [vmem:[#allocation5 + $0x60] sm:$0xff] %v117
    %267 = vst [vmem:[#allocation5 + $0x68] sm:$0xff] %v158
    %268 = vst [vmem:[#allocation5 + $0x70] sm:$0xff] %v199
    %269 = vst [vmem:[#allocation5 + $0x78] sm:$0xff] %v240
    %270 = vst [vmem:[#allocation5 + $0x80] sm:$0xff] %v120
    %271 = vst [vmem:[#allocation5 + $0x88] sm:$0xff] %v161
    %272 = vst [vmem:[#allocation5 + $0x90] sm:$0xff] %v202
    %273 = vst [vmem:[#allocation5 + $0x98] sm:$0xff] %v243
    %274 = vst [vmem:[#allocation5 + $0xa0] sm:$0xff] %v123
    %275 = vst [vmem:[#allocation5 + $0xa8] sm:$0xff] %v164
    %276 = vst [vmem:[#allocation5 + $0xb0] sm:$0xff] %v205
    %277 = vst [vmem:[#allocation5 + $0xb8] sm:$0xff] %v246
    %278 = vst [vmem:[#allocation5 + $0xc0] sm:$0xff] %v126
    %279 = vst [vmem:[#allocation5 + $0xc8] sm:$0xff] %v167
    %280 = vst [vmem:[#allocation5 + $0xd0] sm:$0xff] %v208
    %281 = vst [vmem:[#allocation5 + $0xd8] sm:$0xff] %v249
    %282 = vst [vmem:[#allocation5 + $0xe0] sm:$0xff] %v129
    %283 = vst [vmem:[#allocation5 + $0xe8] sm:$0xff] %v170
    %284 = vst [vmem:[#allocation5 + $0xf0] sm:$0xff] %v211
    %285 = vst [vmem:[#allocation5 + $0xf8] sm:$0xff] %v252
    // Predicated region
    $region18: #{tpu_custom_call.1} parent=1 // pred_check
      _
    $region19: #{tpu_custom_call.1} parent=1 // pred_check_branch
      %287 = sbr.rel (0) target = $region21
    $region20: #{tpu_custom_call.1} parent=1 // pred_region
      %289 = vsyncadd [#allocation4], 0
      %s290 = sshll.u32 [#allocation5], 4
      %s291 = int_to_ptr.vmem [resolvable:$true] %s290
      %s292 = sshll.u32 %s3, 4
      %s293 = int_to_ptr.hbm [resolvable:$true] %s292
      %298 = dma.vmem_to_hbm [thread:$0]  %s291, 4096, %s293, [#allocation4], 512, 512, 32
    $region21: #{tpu_custom_call.1} parent=1 // pred_fallthru
      _
    // Predicated region
    $region22: #{tpu_custom_call.1} parent=1 // pred_check
      _
    $region23: #{tpu_custom_call.1} parent=1 // pred_check_branch
      %300 = sbr.rel (0) target = $region25
    $region24: #{tpu_custom_call.1} parent=1 // pred_region
      %302 = dma.done [#allocation4], 4096
    $region25: #{tpu_custom_call.1} parent=1 // pred_fallthru
      _
    %303 = vsyncpa [#allocation3], 1
    %304 = vsyncpa [#allocation4], 1

</llo_original>
